<compile_context>
chip_gen: v6e
topology: v6e:2x2x1
jax: 0.10.0
libtpu: 0.0.40
codegen_flags: <defaults>
</compile_context>

<pallas_src>
import functools

import jax
import jax.numpy as jnp
from jax.experimental import pallas as pl
from jax.experimental.pallas import tpu as pltpu

_LANES = 128
_SUBLANES = 8
_CHUNK_ROWS = 512          # rows per inner-loop chunk (~256 KiB per f32 temp)


def _round_up(x, m):
    return ((x + m - 1) // m) * m


def _pick_block_rows(r_total, itemsz_combined):
    """Generation-aware row-block size, inner chunk size and VMEM limit."""
    try:
        vmem_cap = pltpu.get_tpu_info().vmem_capacity_bytes
    except Exception:  # pragma: no cover - conservative fallback
        vmem_cap = 64 * 1024 * 1024

    if vmem_cap >= 100 * 1024 * 1024:          # v5e / v6e: 128 MiB physical VMEM
        block_budget = 16 * 1024 * 1024         # combined pred+label bytes/block
        vmem_limit = 64 * 1024 * 1024
    else:                                       # v7x: 64 MiB physical VMEM per TC
        block_budget = 8 * 1024 * 1024
        vmem_limit = 32 * 1024 * 1024

    if r_total < _SUBLANES:
        # Tiny input: single block equal to the full row extent (always legal).
        return r_total, r_total, vmem_limit

    if r_total <= _CHUNK_ROWS:
        rows = (r_total // _SUBLANES) * _SUBLANES   # <= r_total, multiple of 8
        chunk = rows
    else:
        max_rows = max(_CHUNK_ROWS,
                       (block_budget // (_LANES * itemsz_combined))
                       // _CHUNK_ROWS * _CHUNK_ROWS)
        rows = min(max_rows, (r_total // _CHUNK_ROWS) * _CHUNK_ROWS)
        chunk = _CHUNK_ROWS
    return rows, chunk, vmem_limit


def _soft_iou_kernel(pred_ref, label_ref, out_ref, inter_ref, union_ref, *,
                     from_sigmoid, ignore_label, eps, chunk, n_chunks,
                     block_rows, valid_rows, mask_rows):
    """Blocks: pred/label (1, rows, 128); out (1, 1, 128); scratch (1, 8, 128)."""
    step = pl.program_id(1)

    @pl.when(step == 0)
    def _init():
        inter_ref[...] = jnp.zeros_like(inter_ref)
        union_ref[...] = jnp.zeros_like(union_ref)

    def process_chunk(c):
        off = c * chunk
        if not isinstance(off, int):
            off = pl.multiple_of(off, chunk)

        p = pred_ref[:, pl.ds(off, chunk), :].astype(jnp.float32)   # (1,chunk,128)
        lab = label_ref[:, pl.ds(off, chunk), :].astype(jnp.float32)

        # sample_weight = (label != ignore_label), plus the row-tail mask for
        # the (possibly partial / over-rounded) last block.
        keep = lab != ignore_label
        if mask_rows:
            row = (step * block_rows + off
                   + jax.lax.broadcasted_iota(jnp.int32, (1, chunk, 1), 1))
            keep = jnp.logical_and(keep, row < valid_rows)

        if not from_sigmoid:
            p = jax.nn.sigmoid(p)

        # Fold the mask into the operands (equivalent to *sample_weight and it
        # also kills any NaN/Inf garbage in the un-DMA'd tail of the block).
        p = jnp.where(keep, p, 0.0)
        lab = jnp.where(keep, lab, 0.0)

        prod = p * lab
        mx = jnp.maximum(p, lab)

        if chunk % _SUBLANES == 0:
            # Vreg-wise (VPU-only) folds into the (8,128) accumulators; the
            # cross-lane/sublane reduction happens once, in the finalize step.
            inter_ref[...] += jnp.sum(
                prod.reshape(1, chunk // _SUBLANES, _SUBLANES, _LANES), axis=1)
            union_ref[...] += jnp.sum(
                mx.reshape(1, chunk // _SUBLANES, _SUBLANES, _LANES), axis=1)
        else:
            # Tiny inputs only (chunk == r_total < 8 rows).
            inter_ref[:, 0:1, :] += jnp.sum(prod, axis=1, keepdims=True)
            union_ref[:, 0:1, :] += jnp.sum(mx, axis=1, keepdims=True)

    if n_chunks == 1:
        process_chunk(0)
    else:
        def body(c, carry):
            process_chunk(c)
            return carry
        if n_chunks <= 8:
            jax.lax.fori_loop(0, n_chunks, body, 0, unroll=True)
        else:
            jax.lax.fori_loop(0, n_chunks, body, 0)

    @pl.when(step == pl.num_programs(1) - 1)
    def _finalize():
        num = jnp.sum(inter_ref[...], axis=(1, 2), keepdims=True)   # (1,1,1)
        den = jnp.sum(union_ref[...], axis=(1, 2), keepdims=True)
        loss = 1.0 - num / (den + eps)
        out_ref[...] = jnp.broadcast_to(loss, out_ref.shape)


def soft_iou(pred, label, *, from_sigmoid=False, ignore_label=-1):
    """Pallas implementation of SoftIoU.forward.

    pred : (N, C, H, W) logits (or probabilities if from_sigmoid=True)
    label: any shape with N*C*H*W elements (mirrors `label.view(pred.size())`)
    returns: (N,) float32 per-sample loss
    """
    N, C, H, W = pred.shape
    label = jnp.reshape(label, pred.shape)
    L = C * H * W

    pred2 = jnp.reshape(pred, (N, L))       # free reshapes (layout plumbing)
    label2 = jnp.reshape(label, (N, L))

    # Lane alignment only: a (rare, <128 elements/sample) pad when C*H*W is
    # not a multiple of 128.  Row / block alignment is masked in-kernel, so no
    # full extra HBM pass in the common case.
    L_lane = _round_up(L, _LANES)
    if L_lane != L:
        pad = L_lane - L
        pred2 = jnp.pad(pred2, ((0, 0), (0, pad)))
        label2 = jnp.pad(label2, ((0, 0), (0, pad)),
                         constant_values=ignore_label)
    r_total = L_lane // _LANES

    pred3 = jnp.reshape(pred2, (N, r_total, _LANES))
    label3 = jnp.reshape(label2, (N, r_total, _LANES))

    itemsz = (jnp.dtype(pred3.dtype).itemsize
              + jnp.dtype(label3.dtype).itemsize)
    rows, chunk, vmem_limit = _pick_block_rows(r_total, itemsz)
    n_chunks = rows // chunk
    n_steps = pl.cdiv(r_total, rows)
    mask_rows = (n_steps * rows) != r_total

    kernel = functools.partial(
        _soft_iou_kernel,
        from_sigmoid=from_sigmoid,
        ignore_label=float(ignore_label),
        eps=1e-8,
        chunk=chunk,
        n_chunks=n_chunks,
        block_rows=rows,
        valid_rows=r_total,
        mask_rows=mask_rows,
    )

    out = pl.pallas_call(
        kernel,
        out_shape=jax.ShapeDtypeStruct((N, 1, _LANES), jnp.float32),
        grid_spec=pltpu.PrefetchScalarGridSpec(
            num_scalar_prefetch=0,
            grid=(N, n_steps),
            in_specs=[
                pl.BlockSpec((1, rows, _LANES), lambda i, s: (i, s, 0)),
                pl.BlockSpec((1, rows, _LANES), lambda i, s: (i, s, 0)),
            ],
            out_specs=pl.BlockSpec((1, 1, _LANES), lambda i, s: (i, 0, 0)),
            scratch_shapes=[
                pltpu.VMEM((1, _SUBLANES, _LANES), jnp.float32),  # intersection
                pltpu.VMEM((1, _SUBLANES, _LANES), jnp.float32),  # union
            ],
        ),
        compiler_params=pltpu.CompilerParams(
            dimension_semantics=("parallel", "arbitrary"),
            vmem_limit_bytes=vmem_limit,
        ),
    )(pred3, label3)

    return out[:, 0, 0]


def _soft_iou_ref(pred, label, *, from_sigmoid=False, ignore_label=-1):
    """Plain-JAX reference (mirrors the PyTorch forward exactly)."""
    label = jnp.reshape(label, pred.shape).astype(jnp.float32)
    w = (label != ignore_label).astype(jnp.float32)
    p = pred.astype(jnp.float32)
    if not from_sigmoid:
        p = jax.nn.sigmoid(p)
    num = jnp.sum(p * label * w, axis=(1, 2, 3))
    den = jnp.sum(jnp.maximum(p, label) * w, axis=(1, 2, 3)) + 1e-8
    return 1.0 - num / den


if __name__ == "__main__":
    key = jax.random.PRNGKey(0)

    def make_case(k, shape, ignore_frac=0.1):
        k1, k2, k3 = jax.random.split(k, 3)
        pred = jax.random.normal(k1, shape, dtype=jnp.float32)
        label = (jax.random.uniform(k2, shape) > 0.5).astype(jnp.float32)
        ignore = jax.random.uniform(k3, shape) < ignore_frac
        label = jnp.where(ignore, -1.0, label)
        return pred, label

    cases = [
        (2, 4, 16, 16),   # lane-aligned, single block, no tail mask
        (2, 5, 24, 24),   # lane pad + partial last row block (mask path)
        (2, 3, 10, 10),   # tiny: fewer than 8 rows, block == full row extent
    ]
    keys = jax.random.split(key, len(cases))
    for k, shape in zip(keys, cases):
        pred, label = make_case(k, shape)
        loss = jax.block_until_ready(
            soft_iou(pred, label, from_sigmoid=False, ignore_label=-1))
        ref = _soft_iou_ref(pred, label, from_sigmoid=False, ignore_label=-1)
        assert loss.shape == (shape[0],)
        assert jnp.allclose(loss, ref, atol=1e-5, rtol=1e-5), (shape, loss, ref)

    print("KERNEL_OK")
</pallas_src>

<mosaic_0001>
module attributes {stable_mosaic.version = 11 : i64} {
  func.func @_soft_iou_kernel(%arg0: i32, %arg1: i32, %arg2: memref<1x8x128xf32, #tpu.memory_space<vmem>>, %arg3: memref<1x8x128xf32, #tpu.memory_space<vmem>>, %arg4: memref<1x1x128xf32, #tpu.memory_space<vmem>>, %arg5: memref<1x8x128xf32, #tpu.memory_space<vmem>>, %arg6: memref<1x8x128xf32, #tpu.memory_space<vmem>>) attributes {dimension_semantics = [#tpu.dimension_semantics<parallel>, #tpu.dimension_semantics<arbitrary>], iteration_bounds = array<i64: 2, 1>, scalar_prefetch = 0 : i64, scratch_operands = 2 : i64, tpu.core_type = #tpu.core_type<tc>, window_params = [{transform_indices = @transform_0, window_bounds = array<i64: 1, 8, 128>}, {transform_indices = @transform_1, window_bounds = array<i64: 1, 8, 128>}, {transform_indices = @transform_2, window_bounds = array<i64: 1, 1, 128>}]} {
    %c0_i32 = arith.constant 0 : i32
    %0 = arith.cmpi eq, %arg1, %c0_i32 : i32
    %1 = arith.extui %0 : i1 to i32
    %c0_i32_0 = arith.constant 0 : i32
    %2 = arith.cmpi ne, %1, %c0_i32_0 : i32
    scf.if %2 {
      %cst_25 = arith.constant 0.000000e+00 : f32
      %31 = vector.broadcast %cst_25 : f32 to vector<1x8x128xf32>
      %c0_26 = arith.constant 0 : index
      %c0_27 = arith.constant 0 : index
      %c0_28 = arith.constant 0 : index
      %32 = vector.load %arg5[%c0_26, %c0_27, %c0_28] : memref<1x8x128xf32, #tpu.memory_space<vmem>>, vector<1x8x128xf32>
      tpu.vector_store %arg5[%c0_26, %c0_27, %c0_28], %31 {strides = array<i32>} : memref<1x8x128xf32, #tpu.memory_space<vmem>>, vector<1x8x128xf32>,
      %cst_29 = arith.constant 0.000000e+00 : f32
      %33 = vector.broadcast %cst_29 : f32 to vector<1x8x128xf32>
      %c0_30 = arith.constant 0 : index
      %c0_31 = arith.constant 0 : index
      %c0_32 = arith.constant 0 : index
      %34 = vector.load %arg6[%c0_30, %c0_31, %c0_32] : memref<1x8x128xf32, #tpu.memory_space<vmem>>, vector<1x8x128xf32>
      tpu.vector_store %arg6[%c0_30, %c0_31, %c0_32], %33 {strides = array<i32>} : memref<1x8x128xf32, #tpu.memory_space<vmem>>, vector<1x8x128xf32>,
    } else {
    }
    %c0 = arith.constant 0 : index
    %c0_1 = arith.constant 0 : index
    %c0_2 = arith.constant 0 : index
    %3 = vector.load %arg2[%c0, %c0_1, %c0_2] : memref<1x8x128xf32, #tpu.memory_space<vmem>>, vector<1x8x128xf32>
    %c0_3 = arith.constant 0 : index
    %c0_4 = arith.constant 0 : index
    %c0_5 = arith.constant 0 : index
    %4 = vector.load %arg3[%c0_3, %c0_4, %c0_5] : memref<1x8x128xf32, #tpu.memory_space<vmem>>, vector<1x8x128xf32>
    %cst = arith.constant -1.000000e+00 : f32
    %5 = vector.broadcast %cst : f32 to vector<1x8x128xf32>
    %6 = arith.cmpf one, %4, %5 : vector<1x8x128xf32>
    %7 = arith.negf %3 : vector<1x8x128xf32>
    %8 = math.exp %7 : vector<1x8x128xf32>
    %cst_6 = arith.constant 1.000000e+00 : f32
    %9 = vector.broadcast %cst_6 : f32 to vector<1x8x128xf32>
    %10 = arith.addf %9, %8 : vector<1x8x128xf32>
    %11 = arith.divf %9, %10 : vector<1x8x128xf32>
    %cst_7 = arith.constant 0.000000e+00 : f32
    %12 = vector.broadcast %cst_7 : f32 to vector<1x8x128xf32>
    %13 = arith.select %6, %11, %12 : vector<1x8x128xi1>, vector<1x8x128xf32>
    %cst_8 = arith.constant 0.000000e+00 : f32
    %14 = vector.broadcast %cst_8 : f32 to vector<1x8x128xf32>
    %15 = arith.select %6, %4, %14 : vector<1x8x128xi1>, vector<1x8x128xf32>
    %16 = arith.mulf %13, %15 : vector<1x8x128xf32>
    %17 = arith.maximumf %13, %15 : vector<1x8x128xf32>
    %c0_9 = arith.constant 0 : index
    %c0_10 = arith.constant 0 : index
    %c0_11 = arith.constant 0 : index
    %18 = vector.load %arg5[%c0_9, %c0_10, %c0_11] : memref<1x8x128xf32, #tpu.memory_space<vmem>>, vector<1x8x128xf32>
    %19 = vector.shape_cast %16 : vector<1x8x128xf32> to vector<1x1x8x128xf32>
    %cst_12 = arith.constant dense<0.000000e+00> : vector<1x8x128xf32>
    %20 = vector.multi_reduction <add>, %19, %cst_12 [1] : vector<1x1x8x128xf32> to vector<1x8x128xf32>
    %21 = arith.addf %18, %20 : vector<1x8x128xf32>
    %c0_13 = arith.constant 0 : index
    %c0_14 = arith.constant 0 : index
    %c0_15 = arith.constant 0 : index
    %22 = vector.load %arg5[%c0_13, %c0_14, %c0_15] : memref<1x8x128xf32, #tpu.memory_space<vmem>>, vector<1x8x128xf32>
    tpu.vector_store %arg5[%c0_13, %c0_14, %c0_15], %21 {strides = array<i32>} : memref<1x8x128xf32, #tpu.memory_space<vmem>>, vector<1x8x128xf32>,
    %c0_16 = arith.constant 0 : index
    %c0_17 = arith.constant 0 : index
    %c0_18 = arith.constant 0 : index
    %23 = vector.load %arg6[%c0_16, %c0_17, %c0_18] : memref<1x8x128xf32, #tpu.memory_space<vmem>>, vector<1x8x128xf32>
    %24 = vector.shape_cast %17 : vector<1x8x128xf32> to vector<1x1x8x128xf32>
    %cst_19 = arith.constant dense<0.000000e+00> : vector<1x8x128xf32>
    %25 = vector.multi_reduction <add>, %24, %cst_19 [1] : vector<1x1x8x128xf32> to vector<1x8x128xf32>
    %26 = arith.addf %23, %25 : vector<1x8x128xf32>
    %c0_20 = arith.constant 0 : index
    %c0_21 = arith.constant 0 : index
    %c0_22 = arith.constant 0 : index
    %27 = vector.load %arg6[%c0_20, %c0_21, %c0_22] : memref<1x8x128xf32, #tpu.memory_space<vmem>>, vector<1x8x128xf32>
    tpu.vector_store %arg6[%c0_20, %c0_21, %c0_22], %26 {strides = array<i32>} : memref<1x8x128xf32, #tpu.memory_space<vmem>>, vector<1x8x128xf32>,
    %c0_i32_23 = arith.constant 0 : i32
    %28 = arith.cmpi eq, %arg1, %c0_i32_23 : i32
    %29 = arith.extui %28 : i1 to i32
    %c0_i32_24 = arith.constant 0 : i32
    %30 = arith.cmpi ne, %29, %c0_i32_24 : i32
    scf.if %30 {
      %c0_25 = arith.constant 0 : index
      %c0_26 = arith.constant 0 : index
      %c0_27 = arith.constant 0 : index
      %31 = vector.load %arg5[%c0_25, %c0_26, %c0_27] : memref<1x8x128xf32, #tpu.memory_space<vmem>>, vector<1x8x128xf32>
      %cst_28 = arith.constant dense<0.000000e+00> : vector<1xf32>
      %32 = vector.multi_reduction <add>, %31, %cst_28 [1, 2] : vector<1x8x128xf32> to vector<1xf32>
      %33 = vector.shape_cast %32 : vector<1xf32> to vector<1x1x1xf32>
      %c0_29 = arith.constant 0 : index
      %c0_30 = arith.constant 0 : index
      %c0_31 = arith.constant 0 : index
      %34 = vector.load %arg6[%c0_29, %c0_30, %c0_31] : memref<1x8x128xf32, #tpu.memory_space<vmem>>, vector<1x8x128xf32>
      %cst_32 = arith.constant dense<0.000000e+00> : vector<1xf32>
      %35 = vector.multi_reduction <add>, %34, %cst_32 [1, 2] : vector<1x8x128xf32> to vector<1xf32>
      %36 = vector.shape_cast %35 : vector<1xf32> to vector<1x1x1xf32>
      %cst_33 = arith.constant 9.99999993E-9 : f32
      %37 = vector.broadcast %cst_33 : f32 to vector<1x1x1xf32>
      %38 = arith.addf %36, %37 : vector<1x1x1xf32>
      %39 = arith.divf %33, %38 : vector<1x1x1xf32>
      %cst_34 = arith.constant 1.000000e+00 : f32
      %40 = vector.broadcast %cst_34 : f32 to vector<1x1x1xf32>
      %41 = arith.subf %40, %39 : vector<1x1x1xf32>
      %42 = vector.shape_cast %41 : vector<1x1x1xf32> to vector<1x1x1xf32>
      %43 = vector.broadcast %42 : vector<1x1x1xf32> to vector<1x1x128xf32>
      %c0_35 = arith.constant 0 : index
      %c0_36 = arith.constant 0 : index
      %c0_37 = arith.constant 0 : index
      %44 = vector.load %arg4[%c0_35, %c0_36, %c0_37] : memref<1x1x128xf32, #tpu.memory_space<vmem>>, vector<1x1x128xf32>
      tpu.vector_store %arg4[%c0_35, %c0_36, %c0_37], %43 {strides = array<i32>} : memref<1x1x128xf32, #tpu.memory_space<vmem>>, vector<1x1x128xf32>,
    } else {
    }
    return
  }
  func.func @transform_0(%arg0: i32, %arg1: i32) -> (i32, i32, i32) {
    %c0_i32 = arith.constant 0 : i32
    %c0_i32_0 = arith.constant 0 : i32
    return %arg0, %arg1, %c0_i32 : i32, i32, i32
  }
  func.func @transform_1(%arg0: i32, %arg1: i32) -> (i32, i32, i32) {
    %c0_i32 = arith.constant 0 : i32
    %c0_i32_0 = arith.constant 0 : i32
    return %arg0, %arg1, %c0_i32 : i32, i32, i32
  }
  func.func @transform_2(%arg0: i32, %arg1: i32) -> (i32, i32, i32) {
    %c0_i32 = arith.constant 0 : i32
    %c0_i32_0 = arith.constant 0 : i32
    %c0_i32_1 = arith.constant 0 : i32
    return %arg0, %c0_i32, %c0_i32_0 : i32, i32, i32
  }
}

</mosaic_0001>

<llo_original>
// kernel: tpu_custom_call.1
$region0: #{tpu_custom_call.1}
  #allocation0 [shape = 'u32[]', space=smem, size = 0x4, offset = 0x4, fixed_abs, tag = 'smem constant byte address 0x4 - core index']
  #allocation1 [shape = 'u32[144,128]{1,0:T(1,128)}', space=vmem, size = 0x12000, scoped, tag = 'internal scratch']
  #allocation2 [shape = 'f32[1,8,128]{2,1,0:T(8,128)}', space=vmem, size = 0x1000, scoped, tag = 'scratch operand']
  #allocation3 [shape = 'f32[1,8,128]{2,1,0:T(8,128)}', space=vmem, size = 0x1000, scoped, tag = 'scratch operand']
  %s0 = inlined_call_operand.hbm [shape: f32[2,8,128], index: 0, kind: input, shape index: {}]
  %s1 = inlined_call_operand.hbm [shape: f32[2,8,128], index: 1, kind: input, shape index: {}]
  %s2 = inlined_call_operand.hbm [shape: f32[2,1,128], index: 2, kind: output, shape index: {}]
  %s3 = sld [smem:[#allocation0]]
  $region57: #{tpu_custom_call.1} parent=0
    _
  %s5 = ssub.s32 1, %s3
  %s6 = scalar_select 0, %s5, %s3
  $region1: #{tpu_custom_call.1} parent=0
    #allocation4 [shape = 'u8[8192]{0}', space=vmem, size = 0x2000, scoped, tag = 'input window, operand 0']
    #allocation5 [shape = 's32[2]{0}', space=sflag, size = 0x8, scoped, tag = 'scoped memory for tpu_custom_call.1']
    #allocation6 [shape = 's32[2]{0}', space=sflag, size = 0x8, scoped, tag = 'scoped memory for tpu_custom_call.1']
    #allocation7 [shape = 'u8[8192]{0}', space=vmem, size = 0x2000, scoped, tag = 'input window, operand 1']
    #allocation8 [shape = 's32[2]{0}', space=sflag, size = 0x8, scoped, tag = 'scoped memory for tpu_custom_call.1']
    #allocation9 [shape = 'u8[1024]{0}', space=vmem, size = 0x400, scoped, tag = 'output window, operand 0']
    %7 = vsyncpa [#allocation5], 0
    %s8 = scalar_lea.sflag [#allocation5], 1
    %9 = vsyncpa %s8, 0
    %10 = vsyncpa [#allocation8], 0
    %s11 = scalar_lea.sflag [#allocation8], 1
    %12 = vsyncpa %s11, 0
    %13 = vsyncpa [#allocation6], 0
    %s14 = scalar_lea.sflag [#allocation6], 1
    %15 = vsyncpa %s14, 0
    loop: start=0, step=1, limit=4
    $region2: #{tpu_custom_call.1} parent=1 // loop_pre_header
      _
    $region3: #{tpu_custom_call.1} parent=1 // loop_header
      %s17 = sphi 0, %s21
      %p18 = scmp.ge.s32.totalorder %s17, 4
      %s24 = sphi 0, %s36
      %s25 = sphi 0, %s32
      %s26 = sphi 0, %s24
      %s27 = sphi 0, %s25
      %s28 = sphi 0, %s26
      %s29 = sphi 0, %s27
      %s41 = sphi 0, %s43
      %s44 = sphi 0, %s41
      %s45 = sphi 0, %s44
      %s61 = sphi 0, %s45
      %s69 = sphi 0, %s71
      %s72 = sphi 0, %s69
      %s73 = sphi 0, %s72
      %s89 = sphi 0, %s73
      %s95 = sphi 0, %s97
      %s98 = sphi 0, %s95
      %s99 = sphi 0, %s98
      %s115 = sphi 0, %s99
    $region4: #{tpu_custom_call.1} parent=1 // loop_header_branch
      %20 = sbr.rel (%p18) target = $region8
    $region5: #{tpu_custom_call.1} parent=1 // loop_body
      %s22 = ssub.s32 %s17, 1
      %s23 = ssub.s32 %s17, 2
      %s30 = sadd.s32 1, %s25
      %p31 = scmp.ge.s32.totalorder %s30, 1
      %s32 = scalar_select %p31, 0, %s30
      %s33 = sadd.s32 1, %s24
      %s34 = scalar_select %p31, %s33, %s24
      %p35 = scmp.ge.s32.totalorder %s34, 2
      %s36 = scalar_select %p35, 0, %s34
      %s37 = ssub.s32 %s24, %s36
      %s38 = ssub.s32 %s25, %s32
      %s39 = sor.u32 %s37, %s38
      %p40 = scmp.eq.s32.totalorder %s39, 0
      %s42 = sadd.s32 %s41, 1
      %s43 = scalar_select %p40, %s41, %s42
      %p46 = pneg %p40
      %p47 = scmp.eq.s32.totalorder %s17, 1
      %p48 = por %p46, %p47
      %p49 = scmp.ne.s32.totalorder %s41, %s44
      %p50 = scmp.eq.s32.totalorder %s17, 0
      %p51 = por %p49, %p50
      %p52 = scmp.ne.s32.totalorder %s41, %s44
      %p53 = scmp.eq.s32.totalorder %s22, 1
      %p54 = por %p52, %p53
      %p55 = scmp.ne.s32.totalorder %s44, %s45
      %p56 = scmp.eq.s32.totalorder %s22, 0
      %p57 = por %p55, %p56
      %p58 = scmp.ne.s32.totalorder %s44, %s45
      %p59 = scmp.eq.s32.totalorder %s23, 1
      %p60 = por %p58, %p59
      %p62 = scmp.ne.s32.totalorder %s45, %s61
      %p63 = scmp.eq.s32.totalorder %s23, 0
      %p64 = por %p62, %p63
      %s65 = ssub.s32 %s24, %s36
      %s66 = ssub.s32 %s25, %s32
      %s67 = sor.u32 %s65, %s66
      %p68 = scmp.eq.s32.totalorder %s67, 0
      %s70 = sadd.s32 %s69, 1
      %s71 = scalar_select %p68, %s69, %s70
      %p74 = pneg %p68
      %p75 = scmp.eq.s32.totalorder %s17, 1
      %p76 = por %p74, %p75
      %p77 = scmp.ne.s32.totalorder %s69, %s72
      %p78 = scmp.eq.s32.totalorder %s17, 0
      %p79 = por %p77, %p78
      %p80 = scmp.ne.s32.totalorder %s69, %s72
      %p81 = scmp.eq.s32.totalorder %s22, 1
      %p82 = por %p80, %p81
      %p83 = scmp.ne.s32.totalorder %s72, %s73
      %p84 = scmp.eq.s32.totalorder %s22, 0
      %p85 = por %p83, %p84
      %p86 = scmp.ne.s32.totalorder %s72, %s73
      %p87 = scmp.eq.s32.totalorder %s23, 1
      %p88 = por %p86, %p87
      %p90 = scmp.ne.s32.totalorder %s73, %s89
      %p91 = scmp.eq.s32.totalorder %s23, 0
      %p92 = por %p90, %p91
      %s93 = ssub.s32 %s24, %s36
      %p94 = scmp.eq.s32.totalorder %s93, 0
      %s96 = sadd.s32 %s95, 1
      %s97 = scalar_select %p94, %s95, %s96
      %p100 = pneg %p94
      %p101 = scmp.eq.s32.totalorder %s17, 1
      %p102 = por %p100, %p101
      %p103 = scmp.ne.s32.totalorder %s95, %s98
      %p104 = scmp.eq.s32.totalorder %s17, 0
      %p105 = por %p103, %p104
      %p106 = scmp.ne.s32.totalorder %s95, %s98
      %p107 = scmp.eq.s32.totalorder %s22, 1
      %p108 = por %p106, %p107
      %p109 = scmp.ne.s32.totalorder %s98, %s99
      %p110 = scmp.eq.s32.totalorder %s22, 0
      %p111 = por %p109, %p110
      %p112 = scmp.ne.s32.totalorder %s98, %s99
      %p113 = scmp.eq.s32.totalorder %s23, 1
      %p114 = por %p112, %p113
      %p116 = scmp.ne.s32.totalorder %s99, %s115
      %p117 = scmp.eq.s32.totalorder %s23, 0
      %p118 = por %p116, %p117
      %p119 = scmp.le.s32.totalorder 1, %s17
      %p120 = scmp.lt.s32.totalorder %s17, 3
      %p121 = pnand %p119, %p120
      %p122 = pneg %p121
      // Predicated region
      $region9: #{tpu_custom_call.1} parent=5 // pred_check
        _
      $region10: #{tpu_custom_call.1} parent=5 // pred_check_branch
        %124 = sbr.rel (%p121) target = $region12
      $region11: #{tpu_custom_call.1} parent=5 // pred_region
        %s125 = ssub.s32 %s17, 1
      $region12: #{tpu_custom_call.1} parent=5 // pred_fallthru
        _
      %p126 = scmp.lt.s32.totalorder %s17, 2
      // Predicated region
      $region13: #{tpu_custom_call.1} parent=5 // pred_check
        %p127 = pneg %p126
      $region14: #{tpu_custom_call.1} parent=5 // pred_check_branch
        %129 = sbr.rel (%p127) target = $region16
      $region15: #{tpu_custom_call.1} parent=5 // pred_region
        // Predicated region
        $region17: #{tpu_custom_call.1} parent=15 // pred_check
          %p130 = pneg %p51
        $region18: #{tpu_custom_call.1} parent=15 // pred_check_branch
          %132 = sbr.rel (%p130) target = $region20
        $region19: #{tpu_custom_call.1} parent=15 // pred_region
          %s133 = sand.u32 %s41, 1
          %s134 = scalar_lea.sflag [#allocation5], %s133
          %s135 = sand.u32 %s41, 1
          %s136 = smul.addr %s135, 8
          %s137 = scalar_lea.vmem [#allocation4], %s136
          %s139 = ssub.s32 128, 128
          %140 = vsyncadd %s134, %s139
          %s141 = sadd.s32 %s25, %s24
          %s142 = smul.addr %s141, 128
          %s143 = scalar_lea.hbm %s0, %s142
          %s145 = sshll.u32 %s137, 4
          %s146 = int_to_ptr.vmem [resolvable:$true] %s145
          %148 = dma.hbm_to_vmem [thread:$0]  %s143, 128, %s146, %s134
        $region20: #{tpu_custom_call.1} parent=15 // pred_fallthru
          _
        // Predicated region
        $region21: #{tpu_custom_call.1} parent=15 // pred_check
          %p149 = pneg %p79
        $region22: #{tpu_custom_call.1} parent=15 // pred_check_branch
          %151 = sbr.rel (%p149) target = $region24
        $region23: #{tpu_custom_call.1} parent=15 // pred_region
          %s152 = sand.u32 %s69, 1
          %s153 = scalar_lea.sflag [#allocation8], %s152
          %s154 = sand.u32 %s69, 1
          %s155 = smul.addr %s154, 8
          %s156 = scalar_lea.vmem [#allocation7], %s155
          %s158 = ssub.s32 128, 128
          %159 = vsyncadd %s153, %s158
          %s160 = sadd.s32 %s25, %s24
          %s161 = smul.addr %s160, 128
          %s162 = scalar_lea.hbm %s1, %s161
          %s164 = sshll.u32 %s156, 4
          %s165 = int_to_ptr.vmem [resolvable:$true] %s164
          %167 = dma.hbm_to_vmem [thread:$0]  %s162, 128, %s165, %s153
        $region24: #{tpu_custom_call.1} parent=15 // pred_fallthru
          _
      $region16: #{tpu_custom_call.1} parent=5 // pred_fallthru
        _
      %p168 = scmp.le.s32.totalorder 1, %s17
      %p169 = scmp.lt.s32.totalorder %s17, 3
      %p170 = pnand %p168, %p169
      %p171 = pneg %p170
      // Predicated region
      $region25: #{tpu_custom_call.1} parent=5 // pred_check
        _
      $region26: #{tpu_custom_call.1} parent=5 // pred_check_branch
        %173 = sbr.rel (%p170) target = $region28
      $region27: #{tpu_custom_call.1} parent=5 // pred_region
        %s174 = ssub.s32 %s17, 1
        %s175 = sand.u32 %s44, 1
        %s176 = scalar_lea.sflag [#allocation5], %s175
        %s177 = sand.u32 %s44, 1
        %s178 = smul.addr %s177, 8
        %s179 = scalar_lea.vmem [#allocation4], %s178
        // Predicated region
        $region29: #{tpu_custom_call.1} parent=27 // pred_check
          %p180 = pneg %p57
        $region30: #{tpu_custom_call.1} parent=27 // pred_check_branch
          %182 = sbr.rel (%p180) target = $region32
        $region31: #{tpu_custom_call.1} parent=27 // pred_region
          %183 = dma.done %s176, 128
        $region32: #{tpu_custom_call.1} parent=27 // pred_fallthru
          _
        %s184 = sand.u32 %s72, 1
        %s185 = scalar_lea.sflag [#allocation8], %s184
        %s186 = sand.u32 %s72, 1
        %s187 = smul.addr %s186, 8
        %s188 = scalar_lea.vmem [#allocation7], %s187
        // Predicated region
        $region33: #{tpu_custom_call.1} parent=27 // pred_check
          %p189 = pneg %p85
        $region34: #{tpu_custom_call.1} parent=27 // pred_check_branch
          %191 = sbr.rel (%p189) target = $region36
        $region35: #{tpu_custom_call.1} parent=27 // pred_region
          %192 = dma.done %s185, 128
        $region36: #{tpu_custom_call.1} parent=27 // pred_fallthru
          _
        %s193 = sand.u32 %s44, 1
        %s194 = scalar_lea.sflag [#allocation5], %s193
        %s195 = sand.u32 %s44, 1
        %s196 = smul.addr %s195, 8
        %s197 = scalar_lea.vmem [#allocation4], %s196
        %p198 = pneg %p57
        %p199 = pneg %p54
        %s200 = sand.u32 %s72, 1
        %s201 = scalar_lea.sflag [#allocation8], %s200
        %s202 = sand.u32 %s72, 1
        %s203 = smul.addr %s202, 8
        %s204 = scalar_lea.vmem [#allocation7], %s203
        %p205 = pneg %p85
        %p206 = pneg %p82
        %p207 = pneg %p111
        %p208 = pneg %p108
        %s209 = sand.u32 %s98, 1
        %s210 = scalar_lea.sflag [#allocation6], %s209
        %s211 = sand.u32 %s98, 1
        %s212 = scalar_lea.vmem [#allocation9], %s211
        %p213 = scmp.eq.s32.totalorder %s27, 0
        // Predicated region
        $region37: #{tpu_custom_call.1} parent=27 // pred_check
          %p214 = pneg %p213
        $region38: #{tpu_custom_call.1} parent=27 // pred_check_branch
          %216 = sbr.rel (%p214) target = $region40
        $region39: #{tpu_custom_call.1} parent=27 // pred_region
          %217 = vst [vmem:[#allocation2] sm:$0xff] 0.0
          %218 = vst [vmem:[#allocation3] sm:$0xff] 0.0
        $region40: #{tpu_custom_call.1} parent=27 // pred_fallthru
          _
        %v219 = vld [vmem:[%s179] sm:$0xff]
        %v220 = vld [vmem:[%s188] sm:$0xff]
        %vm221 = vcmp.ne.f32.partialorder %v220, -1.0
        %v222 = vxor.u32 %v219, 2147483648
        %v223 = vmul.f32 %v222, 1.442695
        %v224 = vpow.pop %v223
        %v225 = vadd.f32 %v224, 1.0
        %v226 = vrcp.pop %v225
        %v227 = vmul.f32 1.0, %v226
        %v228 = vsel %vm221, %v227, 0.0
        %v229 = vsel %vm221, %v220, 0.0
        %v230 = vmul.f32 %v228, %v229
        %v231 = vmax.f32 %v228, %v229
        %v232 = vld [vmem:[#allocation2] sm:$0xff]
        %v233 = vadd.f32 %v230, 0.0
        %v234 = vadd.f32 %v232, %v233
        %235 = vst [vmem:[#allocation2] sm:$0xff] %v234
        %v236 = vld [vmem:[#allocation3] sm:$0xff]
        %v237 = vadd.f32 %v231, 0.0
        %v238 = vadd.f32 %v236, %v237
        %239 = vst [vmem:[#allocation3] sm:$0xff] %v238
        // Predicated region
        $region41: #{tpu_custom_call.1} parent=27 // pred_check
          %p240 = pneg %p213
        $region42: #{tpu_custom_call.1} parent=27 // pred_check_branch
          %242 = sbr.rel (%p240) target = $region44
        $region43: #{tpu_custom_call.1} parent=27 // pred_region
          %v243 = vld [vmem:[#allocation2] sm:$0xff]
          %244 = vadd.xlane.f32.xlu0 %v243
          %v245 = vpop.xlane.xlu0 %244
          %v246 = vrot.slane %v245, 4
          %v247 = vadd.f32 %v245, %v246
          %v248 = vrot.slane %v247, 2
          %v249 = vadd.f32 %v247, %v248
          %v250 = vrot.slane %v249, 1
          %v251 = vadd.f32 %v249, %v250
          %v252 = vld [vmem:[#allocation3] sm:$0xff]
          %253 = vadd.xlane.f32.xlu0 %v252
          %v254 = vpop.xlane.xlu0 %253
          %v255 = vrot.slane %v254, 4
          %v256 = vadd.f32 %v254, %v255
          %v257 = vrot.slane %v256, 2
          %v258 = vadd.f32 %v256, %v257
          %v259 = vrot.slane %v258, 1
          %v260 = vadd.f32 %v258, %v259
          %v261 = vadd.f32 %v260, 1e-08
          %v262 = vrcp.pop %v261
          %v263 = vmul.f32 %v251, %v262
          %v264 = vsub.f32 1.0, %v263
          %265 = vst [vmem:[%s212] sm:$0x1] %v264
        $region44: #{tpu_custom_call.1} parent=27 // pred_fallthru
          _
        %s266 = sand.u32 %s98, 1
        %s267 = scalar_lea.sflag [#allocation6], %s266
        %s268 = sand.u32 %s98, 1
        %s269 = scalar_lea.vmem [#allocation9], %s268
        // Predicated region
        $region45: #{tpu_custom_call.1} parent=27 // pred_check
          %p270 = pneg %p108
        $region46: #{tpu_custom_call.1} parent=27 // pred_check_branch
          %272 = sbr.rel (%p270) target = $region48
        $region47: #{tpu_custom_call.1} parent=27 // pred_region
          %s274 = ssub.s32 16, 16
          %275 = vsyncadd %s267, %s274
          %s276 = smul.addr %s26, 16
          %s277 = scalar_lea.hbm %s2, %s276
          %s279 = sshll.u32 %s269, 4
          %s280 = int_to_ptr.vmem [resolvable:$true] %s279
          %282 = dma.vmem_to_hbm [thread:$0]  %s280, 16, %s277, %s267
        $region48: #{tpu_custom_call.1} parent=27 // pred_fallthru
          _
      $region28: #{tpu_custom_call.1} parent=5 // pred_fallthru
        _
      %p283 = scmp.le.s32.totalorder 2, %s17
      // Predicated region
      $region49: #{tpu_custom_call.1} parent=5 // pred_check
        %p284 = pneg %p283
      $region50: #{tpu_custom_call.1} parent=5 // pred_check_branch
        %286 = sbr.rel (%p284) target = $region52
      $region51: #{tpu_custom_call.1} parent=5 // pred_region
        %s287 = ssub.s32 %s17, 2
        // Predicated region
        $region53: #{tpu_custom_call.1} parent=51 // pred_check
          %p288 = pneg %p114
        $region54: #{tpu_custom_call.1} parent=51 // pred_check_branch
          %290 = sbr.rel (%p288) target = $region56
        $region55: #{tpu_custom_call.1} parent=51 // pred_region
          %s291 = sand.u32 %s99, 1
          %s292 = scalar_lea.sflag [#allocation6], %s291
          %s293 = sand.u32 %s99, 1
          %s294 = scalar_lea.vmem [#allocation9], %s293
          %295 = dma.done %s292, 16
        $region56: #{tpu_custom_call.1} parent=51 // pred_fallthru
          _
      $region52: #{tpu_custom_call.1} parent=5 // pred_fallthru
        _
    $region6: #{tpu_custom_call.1} parent=1 // loop_footer
      %s21 = sadd.s32 1, %s17
    $region7: #{tpu_custom_call.1} parent=1 // loop_footer_branch
      %16 = sbr.rel target = $region3
    $region8: #{tpu_custom_call.1} parent=1 // loop_exit
      _
    %296 = vsyncpa [#allocation5], 1
    %s297 = scalar_lea.sflag [#allocation5], 1
    %298 = vsyncpa %s297, 1
    %299 = vsyncpa [#allocation8], 1
    %s300 = scalar_lea.sflag [#allocation8], 1
    %301 = vsyncpa %s300, 1
    %302 = vsyncpa [#allocation6], 1
    %s303 = scalar_lea.sflag [#allocation6], 1
    %304 = vsyncpa %s303, 1

</llo_original>
